<compile_context>
chip_gen: v5e
topology: v5e:2x2
jax: 0.10.0
libtpu: 0.0.40
codegen_flags: <defaults>
</compile_context>

<pallas_src>
import functools

import jax
import jax.numpy as jnp
from jax.experimental import pallas as pl
from jax.experimental.pallas import tpu as pltpu


def _rmsnorm_kernel(x_ref, w_ref, o_ref, *, eps, inv_hidden):
    # x_ref: (rows_per_tile, hidden_padded), w_ref: (1, hidden_padded)
    x = x_ref[...].astype(jnp.float32)
    # Sum over the lane axis, divide by the TRUE hidden size so zero lane
    # padding does not bias the mean.
    ss = jnp.sum(x * x, axis=-1, keepdims=True)
    inv = jax.lax.rsqrt(ss * inv_hidden + eps)          # EUP rsqrt (free slot)
    y = x * inv * w_ref[...].astype(jnp.float32)
    o_ref[...] = y.astype(o_ref.dtype)


def _vmem_capacity_bytes():
    """Physical VMEM per TensorCore; conservative fallback if unqueryable."""
    try:
        info = pltpu.get_tpu_info()
        cap = int(getattr(info, "vmem_capacity_bytes", 0))
        if cap >= (32 << 20):
            return cap
    except Exception:
        pass
    return 64 << 20   # v7x per-TC size; a safe lower bound for v5e/v6e too


def _pick_rows_per_tile(n_rows, hidden_padded, itemsize, vmem_limit_bytes):
    """Row-tile size keeping DMA buffers AND f32 temporaries inside VMEM.

    Per grid step the kernel needs roughly:
      2 * rows * hidden * itemsize    double-buffered input tile
      2 * rows * hidden * itemsize    double-buffered output tile
      ~3 * rows * hidden * 4          f32 temporaries (x_f32, x*x, y)
    """
    bytes_per_row = hidden_padded * (4 * itemsize + 12)
    budget = int(vmem_limit_bytes * 0.6)                 # headroom for weight etc.
    max_rows_vmem = max(1, budget // bytes_per_row)
    # HBM roofline saturates around 1-4 MiB per tile buffer; bigger tiles only
    # pressure VMEM / the vreg file.
    max_rows_roofline = max(1, (4 << 20) // (hidden_padded * itemsize))
    rows = min(n_rows, max_rows_vmem, max_rows_roofline)

    # Sublane packing multiple (f32 -> 8, bf16 -> 16, int8/fp8 -> 32).
    mult = max(8, 32 // max(1, itemsize))
    if n_rows <= mult:
        return n_rows                     # one full block (block dim == array dim)

    # Aim for >= 8 grid steps: gives the double buffer work to prefetch against
    # and gives each of v7x's two TensorCores >= 4 parallel blocks.
    rows_for_min_steps = pl.cdiv(n_rows, 8)
    if rows_for_min_steps >= mult:
        rows = min(rows, rows_for_min_steps)

    rows = (rows // mult) * mult if rows >= mult else mult
    return max(mult, min(rows, n_rows))


def llama_rmsnorm(x, weight, *, eps=1e-5, rows_per_tile=None):
    """RMSNorm over the last axis. x: (..., hidden), weight: (hidden,) float32."""
    orig_shape = x.shape
    hidden = orig_shape[-1]
    x2d = x.reshape(-1, hidden)
    n_rows = x2d.shape[0]

    # Lane-dense layout: pad the hidden (lane) axis to a multiple of 128 so
    # stores are unmasked; zero padding, sliced off the output below.
    hidden_padded = ((hidden + 127) // 128) * 128
    if hidden_padded != hidden:
        x2d = jnp.pad(x2d, ((0, 0), (0, hidden_padded - hidden)))
        w_p = jnp.pad(weight, (0, hidden_padded - hidden))
    else:
        w_p = weight
    w2d = w_p.reshape(1, hidden_padded)

    vmem_cap = _vmem_capacity_bytes()
    # ~70% of physical VMEM as the scoped limit; plenty for the <=4 MiB tiles
    # and correct headroom on every generation (v5e/v6e 128 MiB, v7x 64 MiB).
    vmem_limit = min(int(vmem_cap * 0.7), 96 << 20)

    if rows_per_tile is None:
        rows_per_tile = _pick_rows_per_tile(
            n_rows, hidden_padded, x2d.dtype.itemsize, vmem_limit)

    grid = (pl.cdiv(n_rows, rows_per_tile),)
    kernel = functools.partial(
        _rmsnorm_kernel, eps=float(eps), inv_hidden=1.0 / float(hidden))

    out = pl.pallas_call(
        kernel,
        out_shape=jax.ShapeDtypeStruct((n_rows, hidden_padded), x.dtype),
        grid_spec=pltpu.PrefetchScalarGridSpec(
            num_scalar_prefetch=0,
            grid=grid,
            in_specs=[
                pl.BlockSpec((rows_per_tile, hidden_padded), lambda i: (i, 0)),
                # Constant block index -> weight DMA'd once, reused all steps.
                pl.BlockSpec((1, hidden_padded), lambda i: (0, 0)),
            ],
            out_specs=pl.BlockSpec((rows_per_tile, hidden_padded),
                                   lambda i: (i, 0)),
        ),
        compiler_params=pltpu.CompilerParams(
            dimension_semantics=("parallel",),
            vmem_limit_bytes=vmem_limit,
        ),
    )(x2d, w2d)

    if hidden_padded != hidden:
        out = out[:, :hidden]
    return out.reshape(orig_shape)


if __name__ == "__main__":
    key = jax.random.PRNGKey(0)

    # Small shape consistent with the module: (batch=2, seq=8, hidden=32).
    batch, seq, hidden = 2, 8, 32
    x = jax.random.normal(key, (batch, seq, hidden), dtype=jnp.float32)
    weight = jnp.ones((hidden,), dtype=jnp.float32)  # nn.Parameter(torch.ones(...))

    y = llama_rmsnorm(x, weight)
    jax.block_until_ready(y)

    # Reference check in plain JAX (matches the PyTorch forward, eps=1e-5).
    mean = jnp.mean(x.astype(jnp.float32) ** 2, axis=-1, keepdims=True)
    ref = (x * jax.lax.rsqrt(mean + 1e-5) * weight).astype(x.dtype)
    assert y.shape == x.shape and y.dtype == x.dtype
    assert jnp.allclose(y, ref, atol=1e-5, rtol=1e-5), "mismatch vs reference (h=32)"

    # Second check: lane-dense hidden (multiple of 128), bf16, multi-step grid.
    x2 = jax.random.normal(jax.random.PRNGKey(0), (4, 64, 256), dtype=jnp.bfloat16)
    w2 = 1.0 + 0.01 * jnp.arange(256, dtype=jnp.float32)
    y2 = llama_rmsnorm(x2, w2)
    jax.block_until_ready(y2)
    xf = x2.astype(jnp.float32)
    m2 = jnp.mean(xf * xf, axis=-1, keepdims=True)
    ref2 = (xf * jax.lax.rsqrt(m2 + 1e-5) * w2).astype(x2.dtype)
    assert jnp.allclose(y2.astype(jnp.float32), ref2.astype(jnp.float32),
                        atol=2e-2, rtol=2e-2), "mismatch vs reference (h=256)"

    print("KERNEL_OK")
</pallas_src>

<mosaic_0001>
module attributes {stable_mosaic.version = 11 : i64} {
  func.func @_rmsnorm_kernel(%arg0: i32, %arg1: memref<16x128xf32, #tpu.memory_space<vmem>>, %arg2: memref<1x128xf32, #tpu.memory_space<vmem>>, %arg3: memref<16x128xf32, #tpu.memory_space<vmem>>) attributes {dimension_semantics = [#tpu.dimension_semantics<parallel>], iteration_bounds = array<i64: 1>, scalar_prefetch = 0 : i64, scratch_operands = 0 : i64, tpu.core_type = #tpu.core_type<tc>, window_params = [{transform_indices = @transform_0, window_bounds = array<i64: 16, 128>}, {pipeline_mode = #tpu.pipeline_mode<synchronous>, transform_indices = @transform_1, window_bounds = array<i64: 1, 128>}, {transform_indices = @transform_2, window_bounds = array<i64: 16, 128>}]} {
    %c0 = arith.constant 0 : index
    %c0_0 = arith.constant 0 : index
    %0 = vector.load %arg1[%c0, %c0_0] : memref<16x128xf32, #tpu.memory_space<vmem>>, vector<16x128xf32>
    %1 = arith.mulf %0, %0 : vector<16x128xf32>
    %cst = arith.constant dense<0.000000e+00> : vector<16xf32>
    %2 = vector.multi_reduction <add>, %1, %cst [1] : vector<16x128xf32> to vector<16xf32>
    %3 = vector.shape_cast %2 : vector<16xf32> to vector<16x1xf32>
    %cst_1 = arith.constant 3.125000e-02 : f32
    %4 = vector.broadcast %cst_1 : f32 to vector<16x1xf32>
    %5 = arith.mulf %3, %4 : vector<16x1xf32>
    %cst_2 = arith.constant 9.99999974E-6 : f32
    %6 = vector.broadcast %cst_2 : f32 to vector<16x1xf32>
    %7 = arith.addf %5, %6 : vector<16x1xf32>
    %8 = math.rsqrt %7 : vector<16x1xf32>
    %9 = vector.broadcast %8 : vector<16x1xf32> to vector<16x128xf32>
    %10 = arith.mulf %0, %9 : vector<16x128xf32>
    %c0_3 = arith.constant 0 : index
    %c0_4 = arith.constant 0 : index
    %11 = vector.load %arg2[%c0_3, %c0_4] : memref<1x128xf32, #tpu.memory_space<vmem>>, vector<1x128xf32>
    %12 = vector.broadcast %11 : vector<1x128xf32> to vector<16x128xf32>
    %13 = arith.mulf %10, %12 : vector<16x128xf32>
    %c0_5 = arith.constant 0 : index
    %c0_6 = arith.constant 0 : index
    %14 = vector.load %arg3[%c0_5, %c0_6] : memref<16x128xf32, #tpu.memory_space<vmem>>, vector<16x128xf32>
    tpu.vector_store %arg3[%c0_5, %c0_6], %13 {strides = array<i32>} : memref<16x128xf32, #tpu.memory_space<vmem>>, vector<16x128xf32>,
    return
  }
  func.func @transform_0(%arg0: i32) -> (i32, i32) {
    %c0_i32 = arith.constant 0 : i32
    %c0_i32_0 = arith.constant 0 : i32
    return %arg0, %c0_i32 : i32, i32
  }
  func.func @transform_1(%arg0: i32) -> (i32, i32) {
    %c0_i32 = arith.constant 0 : i32
    %c0_i32_0 = arith.constant 0 : i32
    %c0_i32_1 = arith.constant 0 : i32
    return %c0_i32, %c0_i32_0 : i32, i32
  }
  func.func @transform_2(%arg0: i32) -> (i32, i32) {
    %c0_i32 = arith.constant 0 : i32
    %c0_i32_0 = arith.constant 0 : i32
    return %arg0, %c0_i32 : i32, i32
  }
}

</mosaic_0001>

<llo_original>
// kernel: tpu_custom_call.1
$region0: #{tpu_custom_call.1}
  #allocation0 [shape = 'u32[]', space=smem, size = 0x4, offset = 0x4, fixed_abs, tag = 'smem constant byte address 0x4 - core index']
  #allocation1 [shape = 'u32[72,128]{1,0:T(1,128)}', space=vmem, size = 0x9000, scoped, tag = 'internal scratch']
  %s0 = inlined_call_operand.hbm [shape: f32[16,128], index: 0, kind: input, shape index: {}]
  %s1 = inlined_call_operand.hbm [shape: f32[1,128], index: 1, kind: input, shape index: {}]
  %s2 = inlined_call_operand.hbm [shape: f32[16,128], index: 2, kind: output, shape index: {}]
  %s3 = sld [smem:[#allocation0]]
  $region26: #{tpu_custom_call.1} parent=0
    _
  %s5 = ssub.s32 1, %s3
  %s6 = scalar_select 0, %s5, %s3
  $region1: #{tpu_custom_call.1} parent=0
    #allocation2 [shape = 'u8[8192]{0}', space=vmem, size = 0x2000, scoped, tag = 'input window, operand 0, single buffered']
    #allocation3 [shape = 's32[1]{0}', space=sflag, size = 0x4, scoped, tag = 'scoped memory for tpu_custom_call.1']
    #allocation4 [shape = 's32[1]{0}', space=sflag, size = 0x4, scoped, tag = 'scoped memory for tpu_custom_call.1']
    #allocation5 [shape = 'u8[512]{0}', space=vmem, size = 0x400, scoped, tag = 'input window, operand 1, single buffered']
    #allocation6 [shape = 's32[1]{0}', space=sflag, size = 0x4, scoped, tag = 'scoped memory for tpu_custom_call.1']
    #allocation7 [shape = 'u8[8192]{0}', space=vmem, size = 0x2000, scoped, tag = 'output window, operand 0, single buffered']
    %7 = vsyncpa [#allocation3], 0
    %8 = vsyncpa [#allocation6], 0
    %9 = vsyncpa [#allocation4], 0
    // Predicated region
    $region2: #{tpu_custom_call.1} parent=1 // pred_check
      _
    $region3: #{tpu_custom_call.1} parent=1 // pred_check_branch
      %11 = sbr.rel (0) target = $region5
    $region4: #{tpu_custom_call.1} parent=1 // pred_region
      %13 = vsyncadd [#allocation3], 0
      %s14 = sshll.u32 %s0, 4
      %s15 = int_to_ptr.hbm [resolvable:$true] %s14
      %s16 = sshll.u32 [#allocation2], 4
      %s17 = int_to_ptr.vmem [resolvable:$true] %s16
      %22 = dma.hbm_to_vmem [thread:$0]  %s15, 256, %s17, [#allocation3], 128, 128, 8
    $region5: #{tpu_custom_call.1} parent=1 // pred_fallthru
      _
    // Predicated region
    $region6: #{tpu_custom_call.1} parent=1 // pred_check
      _
    $region7: #{tpu_custom_call.1} parent=1 // pred_check_branch
      %24 = sbr.rel (0) target = $region9
    $region8: #{tpu_custom_call.1} parent=1 // pred_region
      %26 = vsyncadd [#allocation6], 0
      %s28 = sshll.u32 %s1, 4
      %s29 = int_to_ptr.hbm [resolvable:$true] %s28
      %s30 = sshll.u32 [#allocation5], 4
      %s31 = int_to_ptr.vmem [resolvable:$true] %s30
      %33 = dma.hbm_to_vmem [thread:$0]  %s29, 16, %s31, [#allocation6]
    $region9: #{tpu_custom_call.1} parent=1 // pred_fallthru
      _
    // Predicated region
    $region10: #{tpu_custom_call.1} parent=1 // pred_check
      _
    $region11: #{tpu_custom_call.1} parent=1 // pred_check_branch
      %35 = sbr.rel (0) target = $region13
    $region12: #{tpu_custom_call.1} parent=1 // pred_region
      %37 = dma.done [#allocation3], 256
    $region13: #{tpu_custom_call.1} parent=1 // pred_fallthru
      _
    // Predicated region
    $region14: #{tpu_custom_call.1} parent=1 // pred_check
      _
    $region15: #{tpu_custom_call.1} parent=1 // pred_check_branch
      %39 = sbr.rel (0) target = $region17
    $region16: #{tpu_custom_call.1} parent=1 // pred_region
      %41 = dma.done [#allocation6], 16
    $region17: #{tpu_custom_call.1} parent=1 // pred_fallthru
      _
    %v42 = vld [vmem:[#allocation2] sm:$0xff]
    %v43 = vld [vmem:[#allocation2 + $0x8] sm:$0xff]
    %v44 = vmul.f32 %v42, %v42
    %v45 = vmul.f32 %v43, %v43
    %46 = vadd.xlane.f32.xlu0 %v44
    %v47 = vpop.xlane.xlu0 %46
    %48 = vadd.xlane.f32.xlu0 %v45
    %v49 = vpop.xlane.xlu0 %48
    %v50 = vmul.f32 %v47, 0.03125
    %v51 = vmul.f32 %v49, 0.03125
    %v52 = vadd.f32 %v50, 1e-05
    %v53 = vadd.f32 %v51, 1e-05
    %v54 = vrsqrt.pop %v52
    %v55 = vmul.f32 %v54, %v52
    %v56 = vmul.f32 %v55, %v54
    %v57 = vmul.f32 0.5, %v56
    %v58 = vsub.f32 1.5, %v57
    %v59 = vmul.f32 %v54, %v58
    %vm60 = vweird.f32 %v52
    %vm61 = vweird.f32 %v54
    %vm62 = vmor %vm60, %vm61
    %v63 = vsel %vm62, %v54, %v59
    %v64 = vrsqrt.pop %v53
    %v65 = vmul.f32 %v64, %v53
    %v66 = vmul.f32 %v65, %v64
    %v67 = vmul.f32 0.5, %v66
    %v68 = vsub.f32 1.5, %v67
    %v69 = vmul.f32 %v64, %v68
    %vm70 = vweird.f32 %v53
    %vm71 = vweird.f32 %v64
    %vm72 = vmor %vm70, %vm71
    %v73 = vsel %vm72, %v64, %v69
    %v74 = vmul.f32 %v42, %v63
    %v75 = vmul.f32 %v43, %v73
    %v76 = vld [vmem:[#allocation5] sm:$0x1]
    %v78 = vperm.slane %v76, 0
    %v80 = vmul.f32 %v74, %v78
    %v81 = vmul.f32 %v75, %v78
    %82 = vst [vmem:[#allocation7] sm:$0xff] %v80
    %83 = vst [vmem:[#allocation7 + $0x8] sm:$0xff] %v81
    // Predicated region
    $region18: #{tpu_custom_call.1} parent=1 // pred_check
      _
    $region19: #{tpu_custom_call.1} parent=1 // pred_check_branch
      %85 = sbr.rel (0) target = $region21
    $region20: #{tpu_custom_call.1} parent=1 // pred_region
      %87 = vsyncadd [#allocation4], 0
      %s88 = sshll.u32 [#allocation7], 4
      %s89 = int_to_ptr.vmem [resolvable:$true] %s88
      %s90 = sshll.u32 %s2, 4
      %s91 = int_to_ptr.hbm [resolvable:$true] %s90
      %96 = dma.vmem_to_hbm [thread:$0]  %s89, 256, %s91, [#allocation4], 128, 128, 8
    $region21: #{tpu_custom_call.1} parent=1 // pred_fallthru
      _
    // Predicated region
    $region22: #{tpu_custom_call.1} parent=1 // pred_check
      _
    $region23: #{tpu_custom_call.1} parent=1 // pred_check_branch
      %98 = sbr.rel (0) target = $region25
    $region24: #{tpu_custom_call.1} parent=1 // pred_region
      %100 = dma.done [#allocation4], 256
    $region25: #{tpu_custom_call.1} parent=1 // pred_fallthru
      _
    %101 = vsyncpa [#allocation3], 1
    %102 = vsyncpa [#allocation6], 1
    %103 = vsyncpa [#allocation4], 1

</llo_original>
